<compile_context>
chip_gen: v7x
topology: tpu7x:2x2x1
jax: 0.10.0
libtpu: 0.0.40
codegen_flags: <defaults>
</compile_context>

<pallas_src>
import jax
import jax.numpy as jnp
from jax.experimental import pallas as pl
from jax.experimental.pallas import tpu as pltpu


# ----------------------------------------------------------------------------
# Kernel: full ActorVAE forward (encoder + reparam + decoder) on one batch tile.
# ----------------------------------------------------------------------------
def actor_vae_kernel(
    # batch-tiled inputs
    sa_ref, eps_ref,
    # encoder params (VMEM-resident)
    we1_ref, be1_ref,
    we2_ref, be2_ref,
    wml_ref, bml_ref,            # fused [mean | log_var] head
    # decoder params (VMEM-resident)
    wd1s_ref, wd1z_ref, bd1_ref,  # wd1s has zero rows for the action part of sa
    wd2_ref, bd2_ref,
    wd3_ref, bd3_ref,
    # batch-tiled outputs
    u_ref, z_ref, ml_ref,
):
    f32 = jnp.float32
    dd = we1_ref.dtype            # matmul operand dtype (f32 or bf16)
    L = eps_ref.shape[-1]

    sa = sa_ref[...]              # (TB, state_dim + action_dim), already dd

    # ---- encoder: h = relu(e1([s, a])); h = relu(e2(h)) ----
    h1 = jnp.dot(sa, we1_ref[...], preferred_element_type=f32) + be1_ref[...]
    h1 = jnp.maximum(h1, 0.0)
    h2 = jnp.dot(h1.astype(dd), we2_ref[...], preferred_element_type=f32) + be2_ref[...]
    h2 = jnp.maximum(h2, 0.0)

    # ---- fused latent heads: [mean | log_var] in one MXU push ----
    ml = jnp.dot(h2.astype(dd), wml_ref[...], preferred_element_type=f32) + bml_ref[...]
    mean = ml[:, :L]
    log_var = ml[:, L:]

    # ---- reparameterize (f32 on the VPU/EUP): z = mean + exp(log_var/2)*eps ----
    z = mean + jnp.exp(log_var * 0.5) * eps_ref[...]

    # ---- decoder: a = relu(d1([s, z])); a = relu(d2(a)); a = d3(a) ----
    d1 = (
        jnp.dot(sa, wd1s_ref[...], preferred_element_type=f32)   # == state @ wd1_s
        + jnp.dot(z.astype(dd), wd1z_ref[...], preferred_element_type=f32)
        + bd1_ref[...]
    )
    d1 = jnp.maximum(d1, 0.0)
    d2 = jnp.dot(d1.astype(dd), wd2_ref[...], preferred_element_type=f32) + bd2_ref[...]
    d2 = jnp.maximum(d2, 0.0)
    u = jnp.dot(d2.astype(dd), wd3_ref[...], preferred_element_type=f32) + bd3_ref[...]

    u_ref[...] = u.astype(u_ref.dtype)
    z_ref[...] = z.astype(z_ref.dtype)
    ml_ref[...] = ml.astype(ml_ref.dtype)     # packed [mean | log_var]


# ----------------------------------------------------------------------------
# Parameter construction (PyTorch nn.Linear default init), canonical layout:
# weights stored as (in_features, out_features) so forward is x @ W + b.
# ----------------------------------------------------------------------------
def _linear_params(key, fan_in, fan_out):
    kw, kb = jax.random.split(key)
    bound = 1.0 / jnp.sqrt(jnp.asarray(fan_in, jnp.float32))
    w = jax.random.uniform(kw, (fan_in, fan_out), jnp.float32, -bound, bound)
    b = jax.random.uniform(kb, (1, fan_out), jnp.float32, -bound, bound)
    return w, b


def init_actor_vae_params(key, state_dim, action_dim, latent_dim, hidden=256):
    keys = jax.random.split(key, 7)
    we1, be1 = _linear_params(keys[0], state_dim + action_dim, hidden)
    we2, be2 = _linear_params(keys[1], hidden, hidden)
    wm, bm = _linear_params(keys[2], hidden, latent_dim)
    wlv, blv = _linear_params(keys[3], hidden, latent_dim)
    wd1, bd1 = _linear_params(keys[4], state_dim + latent_dim, hidden)
    wd2, bd2 = _linear_params(keys[5], hidden, hidden)
    wd3, bd3 = _linear_params(keys[6], hidden, action_dim)
    return dict(we1=we1, be1=be1, we2=we2, be2=be2, wm=wm, bm=bm,
                wlv=wlv, blv=blv, wd1=wd1, bd1=bd1, wd2=wd2, bd2=bd2,
                wd3=wd3, bd3=bd3)


def _prepare_kernel_params(params, state_dim, dot_dtype):
    """Fuse / pad / cast canonical params into the kernel's operand layout."""
    dd = dot_dtype
    hidden = params["wd1"].shape[1]
    n_action = params["we1"].shape[0] - state_dim

    wd1_s = params["wd1"][:state_dim]
    wd1_z = params["wd1"][state_dim:]
    # Zero rows under the action part of `sa` so sa @ wd1_s_pad == state @ wd1_s.
    wd1_s_pad = jnp.concatenate(
        [wd1_s, jnp.zeros((n_action, hidden), wd1_s.dtype)], axis=0)

    wml = jnp.concatenate([params["wm"], params["wlv"]], axis=1)   # (H, 2L)
    bml = jnp.concatenate([params["bm"], params["blv"]], axis=1)   # (1, 2L)

    return (
        params["we1"].astype(dd), params["be1"],
        params["we2"].astype(dd), params["be2"],
        wml.astype(dd), bml,
        wd1_s_pad.astype(dd), wd1_z.astype(dd), params["bd1"],
        params["wd2"].astype(dd), params["bd2"],
        params["wd3"].astype(dd), params["bd3"],
    )


def _pick_batch_tile(batch):
    # 512 is a multiple of 256 (v6e/v7x MXU M tile) and of 128 (v5e MXU);
    # VMEM per step stays < ~3 MiB (resident weights ~0.6 MiB), well within
    # the v7x 64 MiB/TC budget even with double buffering.
    return batch if batch <= 512 else 512


# ----------------------------------------------------------------------------
# Wrapper: batch-tiled pallas_call with VMEM-resident weights.
# ----------------------------------------------------------------------------
def actor_vae_forward(params, state, action, eps, *,
                      dot_dtype=jnp.float32, batch_tile=None):
    B, state_dim = state.shape
    action_dim = action.shape[1]
    latent_dim = eps.shape[1]

    sa = jnp.concatenate([state, action], axis=1).astype(dot_dtype)
    kparams = _prepare_kernel_params(params, state_dim, dot_dtype)

    tb = batch_tile if batch_tile is not None else _pick_batch_tile(B)
    grid = (pl.cdiv(B, tb),)

    def batch_spec(width):
        return pl.BlockSpec((tb, width), lambda i: (i, 0))

    def resident_spec(arr):
        # Full array as one block; constant index map -> stays in VMEM across
        # all grid steps (no per-step re-DMA of the weights).
        return pl.BlockSpec(arr.shape, lambda i: (0, 0))

    in_specs = [batch_spec(state_dim + action_dim), batch_spec(latent_dim)]
    in_specs += [resident_spec(p) for p in kparams]

    out_specs = (
        batch_spec(action_dim),
        batch_spec(latent_dim),
        batch_spec(2 * latent_dim),
    )
    out_shape = (
        jax.ShapeDtypeStruct((B, action_dim), jnp.float32),       # u
        jax.ShapeDtypeStruct((B, latent_dim), jnp.float32),       # z
        jax.ShapeDtypeStruct((B, 2 * latent_dim), jnp.float32),   # [mean|log_var]
    )

    u, z, ml = pl.pallas_call(
        actor_vae_kernel,
        grid=grid,
        out_shape=out_shape,
        in_specs=in_specs,
        out_specs=out_specs,
        compiler_params=pltpu.CompilerParams(
            dimension_semantics=("parallel",)),
    )(sa, eps, *kparams)

    mean = ml[:, :latent_dim]
    log_var = ml[:, latent_dim:]
    return u, z, mean, log_var


# ----------------------------------------------------------------------------
# Pure-JAX reference.
# ----------------------------------------------------------------------------
def actor_vae_reference(params, state, action, eps):
    relu = lambda x: jnp.maximum(x, 0.0)
    sa = jnp.concatenate([state, action], axis=1)
    h1 = relu(sa @ params["we1"] + params["be1"])
    h2 = relu(h1 @ params["we2"] + params["be2"])
    mean = h2 @ params["wm"] + params["bm"]
    log_var = h2 @ params["wlv"] + params["blv"]
    std = jnp.exp(log_var / 2.0)
    z = mean + std * eps
    sz = jnp.concatenate([state, z], axis=1)
    d1 = relu(sz @ params["wd1"] + params["bd1"])
    d2 = relu(d1 @ params["wd2"] + params["bd2"])
    u = d2 @ params["wd3"] + params["bd3"]
    return u, z, mean, log_var


if __name__ == "__main__":
    state_dim, action_dim, latent_dim = 16, 4, 8

    key = jax.random.PRNGKey(0)
    kparams, kdata = jax.random.split(key)
    params = init_actor_vae_params(kparams, state_dim, action_dim, latent_dim)

    def run_check(batch, dot_dtype, atol, rtol):
        ks, ka, ke = jax.random.split(jax.random.fold_in(kdata, batch), 3)
        state = jax.random.normal(ks, (batch, state_dim), jnp.float32)
        action = jax.random.normal(ka, (batch, action_dim), jnp.float32)
        eps = jax.random.normal(ke, (batch, latent_dim), jnp.float32)

        outs = jax.block_until_ready(
            actor_vae_forward(params, state, action, eps, dot_dtype=dot_dtype))
        refs = actor_vae_reference(params, state, action, eps)
        expected_shapes = [(batch, action_dim), (batch, latent_dim),
                           (batch, latent_dim), (batch, latent_dim)]
        for o, r, s in zip(outs, refs, expected_shapes):
            assert o.shape == s
            assert jnp.allclose(o, r, atol=atol, rtol=rtol)

    # Tiny-batch case from the module spec (single full block).
    run_check(batch=2, dot_dtype=jnp.float32, atol=1e-3, rtol=1e-3)
    # Batch-tiled / pipelined path (grid of 2 tiles of 512), f32 operands.
    run_check(batch=1024, dot_dtype=jnp.float32, atol=1e-3, rtol=1e-3)
    # bf16 MXU operand path (v6e/v7x fast path), f32 accumulation; loose check.
    run_check(batch=1024, dot_dtype=jnp.bfloat16, atol=1e-1, rtol=1e-1)

    print("KERNEL_OK")
</pallas_src>

<mosaic_0001>
module attributes {stable_mosaic.version = 11 : i64} {
  func.func @actor_vae_kernel(%arg0: i32, %arg1: memref<2x20xf32, #tpu.memory_space<vmem>>, %arg2: memref<2x8xf32, #tpu.memory_space<vmem>>, %arg3: memref<20x256xf32, #tpu.memory_space<vmem>>, %arg4: memref<1x256xf32, #tpu.memory_space<vmem>>, %arg5: memref<256x256xf32, #tpu.memory_space<vmem>>, %arg6: memref<1x256xf32, #tpu.memory_space<vmem>>, %arg7: memref<256x16xf32, #tpu.memory_space<vmem>>, %arg8: memref<1x16xf32, #tpu.memory_space<vmem>>, %arg9: memref<20x256xf32, #tpu.memory_space<vmem>>, %arg10: memref<8x256xf32, #tpu.memory_space<vmem>>, %arg11: memref<1x256xf32, #tpu.memory_space<vmem>>, %arg12: memref<256x256xf32, #tpu.memory_space<vmem>>, %arg13: memref<1x256xf32, #tpu.memory_space<vmem>>, %arg14: memref<256x4xf32, #tpu.memory_space<vmem>>, %arg15: memref<1x4xf32, #tpu.memory_space<vmem>>, %arg16: memref<2x4xf32, #tpu.memory_space<vmem>>, %arg17: memref<2x8xf32, #tpu.memory_space<vmem>>, %arg18: memref<2x16xf32, #tpu.memory_space<vmem>>) attributes {dimension_semantics = [#tpu.dimension_semantics<parallel>], iteration_bounds = array<i64: 1>, scalar_prefetch = 0 : i64, scratch_operands = 0 : i64, tpu.core_type = #tpu.core_type<tc>, window_params = [{transform_indices = @transform_0, window_bounds = array<i64: 2, 20>}, {transform_indices = @transform_1, window_bounds = array<i64: 2, 8>}, {pipeline_mode = #tpu.pipeline_mode<synchronous>, transform_indices = @transform_2, window_bounds = array<i64: 20, 256>}, {pipeline_mode = #tpu.pipeline_mode<synchronous>, transform_indices = @transform_3, window_bounds = array<i64: 1, 256>}, {pipeline_mode = #tpu.pipeline_mode<synchronous>, transform_indices = @transform_4, window_bounds = array<i64: 256, 256>}, {pipeline_mode = #tpu.pipeline_mode<synchronous>, transform_indices = @transform_5, window_bounds = array<i64: 1, 256>}, {pipeline_mode = #tpu.pipeline_mode<synchronous>, transform_indices = @transform_6, window_bounds = array<i64: 256, 16>}, {pipeline_mode = #tpu.pipeline_mode<synchronous>, transform_indices = @transform_7, window_bounds = array<i64: 1, 16>}, {pipeline_mode = #tpu.pipeline_mode<synchronous>, transform_indices = @transform_8, window_bounds = array<i64: 20, 256>}, {pipeline_mode = #tpu.pipeline_mode<synchronous>, transform_indices = @transform_9, window_bounds = array<i64: 8, 256>}, {pipeline_mode = #tpu.pipeline_mode<synchronous>, transform_indices = @transform_10, window_bounds = array<i64: 1, 256>}, {pipeline_mode = #tpu.pipeline_mode<synchronous>, transform_indices = @transform_11, window_bounds = array<i64: 256, 256>}, {pipeline_mode = #tpu.pipeline_mode<synchronous>, transform_indices = @transform_12, window_bounds = array<i64: 1, 256>}, {pipeline_mode = #tpu.pipeline_mode<synchronous>, transform_indices = @transform_13, window_bounds = array<i64: 256, 4>}, {pipeline_mode = #tpu.pipeline_mode<synchronous>, transform_indices = @transform_14, window_bounds = array<i64: 1, 4>}, {transform_indices = @transform_15, window_bounds = array<i64: 2, 4>}, {transform_indices = @transform_16, window_bounds = array<i64: 2, 8>}, {transform_indices = @transform_17, window_bounds = array<i64: 2, 16>}]} {
    %c0 = arith.constant 0 : index
    %c0_0 = arith.constant 0 : index
    %0 = vector.load %arg1[%c0, %c0_0] : memref<2x20xf32, #tpu.memory_space<vmem>>, vector<2x20xf32>
    %c0_1 = arith.constant 0 : index
    %c0_2 = arith.constant 0 : index
    %1 = vector.load %arg3[%c0_1, %c0_2] : memref<20x256xf32, #tpu.memory_space<vmem>>, vector<20x256xf32>
    %cst = arith.constant dense<0.000000e+00> : vector<2x256xf32>
    %2 = tpu.matmul %0, %1, %cst {dimension_numbers = #tpu.dot_dimension_numbers<[1], [0], [0], [1], [0, 0, 1, 1], [], []>} : vector<2x20xf32>, vector<20x256xf32>, vector<2x256xf32> -> vector<2x256xf32>
    %c0_3 = arith.constant 0 : index
    %c0_4 = arith.constant 0 : index
    %3 = vector.load %arg4[%c0_3, %c0_4] : memref<1x256xf32, #tpu.memory_space<vmem>>, vector<1x256xf32>
    %4 = vector.broadcast %3 : vector<1x256xf32> to vector<2x256xf32>
    %5 = arith.addf %2, %4 : vector<2x256xf32>
    %cst_5 = arith.constant 0.000000e+00 : f32
    %6 = vector.broadcast %cst_5 : f32 to vector<2x256xf32>
    %7 = arith.maximumf %5, %6 : vector<2x256xf32>
    %c0_6 = arith.constant 0 : index
    %c0_7 = arith.constant 0 : index
    %8 = vector.load %arg5[%c0_6, %c0_7] : memref<256x256xf32, #tpu.memory_space<vmem>>, vector<256x256xf32>
    %cst_8 = arith.constant dense<0.000000e+00> : vector<2x256xf32>
    %9 = tpu.matmul %7, %8, %cst_8 {dimension_numbers = #tpu.dot_dimension_numbers<[1], [0], [0], [1], [0, 0, 1, 1], [], []>} : vector<2x256xf32>, vector<256x256xf32>, vector<2x256xf32> -> vector<2x256xf32>
    %c0_9 = arith.constant 0 : index
    %c0_10 = arith.constant 0 : index
    %10 = vector.load %arg6[%c0_9, %c0_10] : memref<1x256xf32, #tpu.memory_space<vmem>>, vector<1x256xf32>
    %11 = vector.broadcast %10 : vector<1x256xf32> to vector<2x256xf32>
    %12 = arith.addf %9, %11 : vector<2x256xf32>
    %cst_11 = arith.constant 0.000000e+00 : f32
    %13 = vector.broadcast %cst_11 : f32 to vector<2x256xf32>
    %14 = arith.maximumf %12, %13 : vector<2x256xf32>
    %c0_12 = arith.constant 0 : index
    %c0_13 = arith.constant 0 : index
    %15 = vector.load %arg7[%c0_12, %c0_13] : memref<256x16xf32, #tpu.memory_space<vmem>>, vector<256x16xf32>
    %cst_14 = arith.constant dense<0.000000e+00> : vector<2x16xf32>
    %16 = tpu.matmul %14, %15, %cst_14 {dimension_numbers = #tpu.dot_dimension_numbers<[1], [0], [0], [1], [0, 0, 1, 1], [], []>} : vector<2x256xf32>, vector<256x16xf32>, vector<2x16xf32> -> vector<2x16xf32>
    %c0_15 = arith.constant 0 : index
    %c0_16 = arith.constant 0 : index
    %17 = vector.load %arg8[%c0_15, %c0_16] : memref<1x16xf32, #tpu.memory_space<vmem>>, vector<1x16xf32>
    %18 = vector.broadcast %17 : vector<1x16xf32> to vector<2x16xf32>
    %19 = arith.addf %16, %18 : vector<2x16xf32>
    %20 = vector.extract_strided_slice %19 {offsets = [0, 0], sizes = [2, 8], strides = [1, 1]} : vector<2x16xf32> to vector<2x8xf32>
    %21 = vector.extract_strided_slice %19 {offsets = [0, 8], sizes = [2, 8], strides = [1, 1]} : vector<2x16xf32> to vector<2x8xf32>
    %cst_17 = arith.constant 5.000000e-01 : f32
    %22 = vector.broadcast %cst_17 : f32 to vector<2x8xf32>
    %23 = arith.mulf %21, %22 : vector<2x8xf32>
    %24 = math.exp %23 : vector<2x8xf32>
    %c0_18 = arith.constant 0 : index
    %c0_19 = arith.constant 0 : index
    %25 = vector.load %arg2[%c0_18, %c0_19] : memref<2x8xf32, #tpu.memory_space<vmem>>, vector<2x8xf32>
    %26 = arith.mulf %24, %25 : vector<2x8xf32>
    %27 = arith.addf %20, %26 : vector<2x8xf32>
    %c0_20 = arith.constant 0 : index
    %c0_21 = arith.constant 0 : index
    %28 = vector.load %arg9[%c0_20, %c0_21] : memref<20x256xf32, #tpu.memory_space<vmem>>, vector<20x256xf32>
    %cst_22 = arith.constant dense<0.000000e+00> : vector<2x256xf32>
    %29 = tpu.matmul %0, %28, %cst_22 {dimension_numbers = #tpu.dot_dimension_numbers<[1], [0], [0], [1], [0, 0, 1, 1], [], []>} : vector<2x20xf32>, vector<20x256xf32>, vector<2x256xf32> -> vector<2x256xf32>
    %c0_23 = arith.constant 0 : index
    %c0_24 = arith.constant 0 : index
    %30 = vector.load %arg10[%c0_23, %c0_24] : memref<8x256xf32, #tpu.memory_space<vmem>>, vector<8x256xf32>
    %cst_25 = arith.constant dense<0.000000e+00> : vector<2x256xf32>
    %31 = tpu.matmul %27, %30, %cst_25 {dimension_numbers = #tpu.dot_dimension_numbers<[1], [0], [0], [1], [0, 0, 1, 1], [], []>} : vector<2x8xf32>, vector<8x256xf32>, vector<2x256xf32> -> vector<2x256xf32>
    %32 = arith.addf %29, %31 : vector<2x256xf32>
    %c0_26 = arith.constant 0 : index
    %c0_27 = arith.constant 0 : index
    %33 = vector.load %arg11[%c0_26, %c0_27] : memref<1x256xf32, #tpu.memory_space<vmem>>, vector<1x256xf32>
    %34 = vector.broadcast %33 : vector<1x256xf32> to vector<2x256xf32>
    %35 = arith.addf %32, %34 : vector<2x256xf32>
    %cst_28 = arith.constant 0.000000e+00 : f32
    %36 = vector.broadcast %cst_28 : f32 to vector<2x256xf32>
    %37 = arith.maximumf %35, %36 : vector<2x256xf32>
    %c0_29 = arith.constant 0 : index
    %c0_30 = arith.constant 0 : index
    %38 = vector.load %arg12[%c0_29, %c0_30] : memref<256x256xf32, #tpu.memory_space<vmem>>, vector<256x256xf32>
    %cst_31 = arith.constant dense<0.000000e+00> : vector<2x256xf32>
    %39 = tpu.matmul %37, %38, %cst_31 {dimension_numbers = #tpu.dot_dimension_numbers<[1], [0], [0], [1], [0, 0, 1, 1], [], []>} : vector<2x256xf32>, vector<256x256xf32>, vector<2x256xf32> -> vector<2x256xf32>
    %c0_32 = arith.constant 0 : index
    %c0_33 = arith.constant 0 : index
    %40 = vector.load %arg13[%c0_32, %c0_33] : memref<1x256xf32, #tpu.memory_space<vmem>>, vector<1x256xf32>
    %41 = vector.broadcast %40 : vector<1x256xf32> to vector<2x256xf32>
    %42 = arith.addf %39, %41 : vector<2x256xf32>
    %cst_34 = arith.constant 0.000000e+00 : f32
    %43 = vector.broadcast %cst_34 : f32 to vector<2x256xf32>
    %44 = arith.maximumf %42, %43 : vector<2x256xf32>
    %c0_35 = arith.constant 0 : index
    %c0_36 = arith.constant 0 : index
    %45 = vector.load %arg14[%c0_35, %c0_36] : memref<256x4xf32, #tpu.memory_space<vmem>>, vector<256x4xf32>
    %cst_37 = arith.constant dense<0.000000e+00> : vector<2x4xf32>
    %46 = tpu.matmul %44, %45, %cst_37 {dimension_numbers = #tpu.dot_dimension_numbers<[1], [0], [0], [1], [0, 0, 1, 1], [], []>} : vector<2x256xf32>, vector<256x4xf32>, vector<2x4xf32> -> vector<2x4xf32>
    %c0_38 = arith.constant 0 : index
    %c0_39 = arith.constant 0 : index
    %47 = vector.load %arg15[%c0_38, %c0_39] : memref<1x4xf32, #tpu.memory_space<vmem>>, vector<1x4xf32>
    %48 = vector.broadcast %47 : vector<1x4xf32> to vector<2x4xf32>
    %49 = arith.addf %46, %48 : vector<2x4xf32>
    %c0_40 = arith.constant 0 : index
    %c0_41 = arith.constant 0 : index
    %50 = vector.load %arg16[%c0_40, %c0_41] : memref<2x4xf32, #tpu.memory_space<vmem>>, vector<2x4xf32>
    tpu.vector_store %arg16[%c0_40, %c0_41], %49 {strides = array<i32>} : memref<2x4xf32, #tpu.memory_space<vmem>>, vector<2x4xf32>,
    %c0_42 = arith.constant 0 : index
    %c0_43 = arith.constant 0 : index
    %51 = vector.load %arg17[%c0_42, %c0_43] : memref<2x8xf32, #tpu.memory_space<vmem>>, vector<2x8xf32>
    tpu.vector_store %arg17[%c0_42, %c0_43], %27 {strides = array<i32>} : memref<2x8xf32, #tpu.memory_space<vmem>>, vector<2x8xf32>,
    %c0_44 = arith.constant 0 : index
    %c0_45 = arith.constant 0 : index
    %52 = vector.load %arg18[%c0_44, %c0_45] : memref<2x16xf32, #tpu.memory_space<vmem>>, vector<2x16xf32>
    tpu.vector_store %arg18[%c0_44, %c0_45], %19 {strides = array<i32>} : memref<2x16xf32, #tpu.memory_space<vmem>>, vector<2x16xf32>,
    return
  }
  func.func @transform_0(%arg0: i32) -> (i32, i32) {
    %c0_i32 = arith.constant 0 : i32
    %c0_i32_0 = arith.constant 0 : i32
    return %arg0, %c0_i32 : i32, i32
  }
  func.func @transform_1(%arg0: i32) -> (i32, i32) {
    %c0_i32 = arith.constant 0 : i32
    %c0_i32_0 = arith.constant 0 : i32
    return %arg0, %c0_i32 : i32, i32
  }
  func.func @transform_2(%arg0: i32) -> (i32, i32) {
    %c0_i32 = arith.constant 0 : i32
    %c0_i32_0 = arith.constant 0 : i32
    %c0_i32_1 = arith.constant 0 : i32
    return %c0_i32, %c0_i32_0 : i32, i32
  }
  func.func @transform_3(%arg0: i32) -> (i32, i32) {
    %c0_i32 = arith.constant 0 : i32
    %c0_i32_0 = arith.constant 0 : i32
    %c0_i32_1 = arith.constant 0 : i32
    return %c0_i32, %c0_i32_0 : i32, i32
  }
  func.func @transform_4(%arg0: i32) -> (i32, i32) {
    %c0_i32 = arith.constant 0 : i32
    %c0_i32_0 = arith.constant 0 : i32
    %c0_i32_1 = arith.constant 0 : i32
    return %c0_i32, %c0_i32_0 : i32, i32
  }
  func.func @transform_5(%arg0: i32) -> (i32, i32) {
    %c0_i32 = arith.constant 0 : i32
    %c0_i32_0 = arith.constant 0 : i32
    %c0_i32_1 = arith.constant 0 : i32
    return %c0_i32, %c0_i32_0 : i32, i32
  }
  func.func @transform_6(%arg0: i32) -> (i32, i32) {
    %c0_i32 = arith.constant 0 : i32
    %c0_i32_0 = arith.constant 0 : i32
    %c0_i32_1 = arith.constant 0 : i32
    return %c0_i32, %c0_i32_0 : i32, i32
  }
  func.func @transform_7(%arg0: i32) -> (i32, i32) {
    %c0_i32 = arith.constant 0 : i32
    %c0_i32_0 = arith.constant 0 : i32
    %c0_i32_1 = arith.constant 0 : i32
    return %c0_i32, %c0_i32_0 : i32, i32
  }
  func.func @transform_8(%arg0: i32) -> (i32, i32) {
    %c0_i32 = arith.constant 0 : i32
    %c0_i32_0 = arith.constant 0 : i32
    %c0_i32_1 = arith.constant 0 : i32
    return %c0_i32, %c0_i32_0 : i32, i32
  }
  func.func @transform_9(%arg0: i32) -> (i32, i32) {
    %c0_i32 = arith.constant 0 : i32
    %c0_i32_0 = arith.constant 0 : i32
    %c0_i32_1 = arith.constant 0 : i32
    return %c0_i32, %c0_i32_0 : i32, i32
  }
  func.func @transform_10(%arg0: i32) -> (i32, i32) {
    %c0_i32 = arith.constant 0 : i32
    %c0_i32_0 = arith.constant 0 : i32
    %c0_i32_1 = arith.constant 0 : i32
    return %c0_i32, %c0_i32_0 : i32, i32
  }
  func.func @transform_11(%arg0: i32) -> (i32, i32) {
    %c0_i32 = arith.constant 0 : i32
    %c0_i32_0 = arith.constant 0 : i32
    %c0_i32_1 = arith.constant 0 : i32
    return %c0_i32, %c0_i32_0 : i32, i32
  }
  func.func @transform_12(%arg0: i32) -> (i32, i32) {
    %c0_i32 = arith.constant 0 : i32
    %c0_i32_0 = arith.constant 0 : i32
    %c0_i32_1 = arith.constant 0 : i32
    return %c0_i32, %c0_i32_0 : i32, i32
  }
  func.func @transform_13(%arg0: i32) -> (i32, i32) {
    %c0_i32 = arith.constant 0 : i32
    %c0_i32_0 = arith.constant 0 : i32
    %c0_i32_1 = arith.constant 0 : i32
    return %c0_i32, %c0_i32_0 : i32, i32
  }
  func.func @transform_14(%arg0: i32) -> (i32, i32) {
    %c0_i32 = arith.constant 0 : i32
    %c0_i32_0 = arith.constant 0 : i32
    %c0_i32_1 = arith.constant 0 : i32
    return %c0_i32, %c0_i32_0 : i32, i32
  }
  func.func @transform_15(%arg0: i32) -> (i32, i32) {
    %c0_i32 = arith.constant 0 : i32
    %c0_i32_0 = arith.constant 0 : i32
    return %arg0, %c0_i32 : i32, i32
  }
  func.func @transform_16(%arg0: i32) -> (i32, i32) {
    %c0_i32 = arith.constant 0 : i32
    %c0_i32_0 = arith.constant 0 : i32
    return %arg0, %c0_i32 : i32, i32
  }
  func.func @transform_17(%arg0: i32) -> (i32, i32) {
    %c0_i32 = arith.constant 0 : i32
    %c0_i32_0 = arith.constant 0 : i32
    return %arg0, %c0_i32 : i32, i32
  }
}

</mosaic_0001>

<llo_original>
// kernel: tpu_custom_call.1
$region0: #{tpu_custom_call.1}
  #allocation0 [shape = 'u32[]', space=smem, size = 0x4, offset = 0x4, fixed_abs, tag = 'smem constant byte address 0x4 - core index']
  #allocation1 [shape = 'u32[144,128]{1,0:T(1,128)}', space=vmem, size = 0x12000, scoped, tag = 'internal scratch']
  %s0 = inlined_call_operand.vmem [shape: f32[2,20], index: 0, kind: input, shape index: {}]
  %s1 = inlined_call_operand.hbm [shape: f32[2,8], index: 1, kind: input, shape index: {}]
  %s2 = inlined_call_operand.vmem [shape: f32[20,256], index: 2, kind: input, shape index: {}]
  %s3 = inlined_call_operand.hbm [shape: f32[1,256], index: 3, kind: input, shape index: {}]
  %s4 = inlined_call_operand.vmem [shape: f32[256,256], index: 4, kind: input, shape index: {}]
  %s5 = inlined_call_operand.hbm [shape: f32[1,256], index: 5, kind: input, shape index: {}]
  %s6 = inlined_call_operand.vmem [shape: f32[256,16], index: 6, kind: input, shape index: {}]
  %s7 = inlined_call_operand.hbm [shape: f32[1,16], index: 7, kind: input, shape index: {}]
  %s8 = inlined_call_operand.hbm [shape: f32[20,256], index: 8, kind: input, shape index: {}]
  %s9 = inlined_call_operand.vmem [shape: f32[8,256], index: 9, kind: input, shape index: {}]
  %s10 = inlined_call_operand.vmem [shape: f32[1,256], index: 10, kind: input, shape index: {}]
  %s11 = inlined_call_operand.hbm [shape: f32[256,256], index: 11, kind: input, shape index: {}]
  %s12 = inlined_call_operand.vmem [shape: f32[1,256], index: 12, kind: input, shape index: {}]
  %s13 = inlined_call_operand.vmem [shape: f32[256,4], index: 13, kind: input, shape index: {}]
  %s14 = inlined_call_operand.vmem [shape: f32[1,4], index: 14, kind: input, shape index: {}]
  %s15 = inlined_call_operand.hbm [shape: f32[2,4], index: 15, kind: output, shape index: {0}]
  %s16 = inlined_call_operand.hbm [shape: f32[2,8], index: 16, kind: output, shape index: {1}]
  %s17 = inlined_call_operand.hbm [shape: f32[2,16], index: 17, kind: output, shape index: {2}]
  %18 = xla_tuple %s15, %s16, %s17
  %s19 = sld [smem:[#allocation0]]
  $region110: #{tpu_custom_call.1} parent=0
    _
  %s21 = ssub.s32 1, %s19
  %s22 = scalar_select 0, %s21, %s19
  $region1: #{tpu_custom_call.1} parent=0
    #allocation2 [shape = 'u8[1024]{0}', space=vmem, size = 0x400, scoped, tag = 'input window, operand 1, single buffered']
    #allocation3 [shape = 's32[1]{0}', space=sflag, size = 0x4, scoped, tag = 'scoped memory for tpu_custom_call.1']
    #allocation4 [shape = 's32[1]{0}', space=sflag, size = 0x4, scoped, tag = 'scoped memory for tpu_custom_call.1']
    #allocation5 [shape = 'u8[1024]{0}', space=vmem, size = 0x400, scoped, tag = 'input window, operand 3, single buffered']
    #allocation6 [shape = 's32[1]{0}', space=sflag, size = 0x4, scoped, tag = 'scoped memory for tpu_custom_call.1']
    #allocation7 [shape = 'u8[1024]{0}', space=vmem, size = 0x400, scoped, tag = 'input window, operand 5, single buffered']
    #allocation8 [shape = 'u8[512]{0}', space=vmem, size = 0x400, scoped, tag = 'input window, operand 7, single buffered']
    #allocation9 [shape = 's32[1]{0}', space=sflag, size = 0x4, scoped, tag = 'scoped memory for tpu_custom_call.1']
    #allocation10 [shape = 'u8[24576]{0}', space=vmem, size = 0x6000, scoped, tag = 'input window, operand 8, single buffered']
    #allocation11 [shape = 'u8[262144]{0}', space=vmem, size = 0x40000, scoped, tag = 'input window, operand 11, single buffered']
    #allocation12 [shape = 's32[1]{0}', space=sflag, size = 0x4, scoped, tag = 'scoped memory for tpu_custom_call.1']
    #allocation13 [shape = 'u8[1024]{0}', space=vmem, size = 0x400, scoped, tag = 'output window, operand 0, single buffered']
    #allocation14 [shape = 'u8[1024]{0}', space=vmem, size = 0x400, scoped, tag = 'output window, operand 1, single buffered']
    #allocation15 [shape = 's32[1]{0}', space=sflag, size = 0x4, scoped, tag = 'scoped memory for tpu_custom_call.1']
    #allocation16 [shape = 'u8[1024]{0}', space=vmem, size = 0x400, scoped, tag = 'output window, operand 2, single buffered']
    %23 = vsyncpa [#allocation3], 0
    %24 = vsyncpa [#allocation6], 0
    %25 = vsyncpa [#allocation9], 0
    %26 = vsyncpa [#allocation12], 0
    %27 = vsyncpa [#allocation4], 0
    %28 = vsyncpa [#allocation15], 0
    // Predicated region
    $region2: #{tpu_custom_call.1} parent=1 // pred_check
      _
    $region3: #{tpu_custom_call.1} parent=1 // pred_check_branch
      %30 = sbr.rel (0) target = $region5
    $region4: #{tpu_custom_call.1} parent=1 // pred_region
      _
    $region5: #{tpu_custom_call.1} parent=1 // pred_fallthru
      _
    // Predicated region
    $region6: #{tpu_custom_call.1} parent=1 // pred_check
      _
    $region7: #{tpu_custom_call.1} parent=1 // pred_check_branch
      %32 = sbr.rel (0) target = $region9
    $region8: #{tpu_custom_call.1} parent=1 // pred_region
      %s34 = ssub.s32 32, 32
      %35 = vsyncadd [#allocation3], %s34
      %s37 = sshll.u32 [#allocation2], 4
      %s38 = int_to_ptr.vmem [resolvable:$true] %s37
      %40 = dma.hbm_to_vmem [thread:$0]  %s1, 32, %s38, [#allocation3]
    $region9: #{tpu_custom_call.1} parent=1 // pred_fallthru
      _
    // Predicated region
    $region10: #{tpu_custom_call.1} parent=1 // pred_check
      _
    $region11: #{tpu_custom_call.1} parent=1 // pred_check_branch
      %42 = sbr.rel (0) target = $region13
    $region12: #{tpu_custom_call.1} parent=1 // pred_region
      _
    $region13: #{tpu_custom_call.1} parent=1 // pred_fallthru
      _
    // Predicated region
    $region14: #{tpu_custom_call.1} parent=1 // pred_check
      _
    $region15: #{tpu_custom_call.1} parent=1 // pred_check_branch
      %44 = sbr.rel (0) target = $region17
    $region16: #{tpu_custom_call.1} parent=1 // pred_region
      %s46 = ssub.s32 32, 32
      %47 = vsyncadd [#allocation6], %s46
      %s49 = sshll.u32 [#allocation5], 4
      %s50 = int_to_ptr.vmem [resolvable:$true] %s49
      %52 = dma.hbm_to_vmem [thread:$0]  %s3, 32, %s50, [#allocation6]
    $region17: #{tpu_custom_call.1} parent=1 // pred_fallthru
      _
    // Predicated region
    $region18: #{tpu_custom_call.1} parent=1 // pred_check
      _
    $region19: #{tpu_custom_call.1} parent=1 // pred_check_branch
      %54 = sbr.rel (0) target = $region21
    $region20: #{tpu_custom_call.1} parent=1 // pred_region
      _
    $region21: #{tpu_custom_call.1} parent=1 // pred_fallthru
      _
    // Predicated region
    $region22: #{tpu_custom_call.1} parent=1 // pred_check
      _
    $region23: #{tpu_custom_call.1} parent=1 // pred_check_branch
      %56 = sbr.rel (0) target = $region25
    $region24: #{tpu_custom_call.1} parent=1 // pred_region
      %s58 = ssub.s32 32, 32
      %59 = vsyncadd [#allocation6], %s58
      %s61 = sshll.u32 [#allocation7], 4
      %s62 = int_to_ptr.vmem [resolvable:$true] %s61
      %64 = dma.hbm_to_vmem [thread:$0]  %s5, 32, %s62, [#allocation6]
    $region25: #{tpu_custom_call.1} parent=1 // pred_fallthru
      _
    // Predicated region
    $region26: #{tpu_custom_call.1} parent=1 // pred_check
      _
    $region27: #{tpu_custom_call.1} parent=1 // pred_check_branch
      %66 = sbr.rel (0) target = $region29
    $region28: #{tpu_custom_call.1} parent=1 // pred_region
      _
    $region29: #{tpu_custom_call.1} parent=1 // pred_fallthru
      _
    // Predicated region
    $region30: #{tpu_custom_call.1} parent=1 // pred_check
      _
    $region31: #{tpu_custom_call.1} parent=1 // pred_check_branch
      %68 = sbr.rel (0) target = $region33
    $region32: #{tpu_custom_call.1} parent=1 // pred_region
      %s70 = ssub.s32 16, 16
      %71 = vsyncadd [#allocation9], %s70
      %s73 = sshll.u32 [#allocation8], 4
      %s74 = int_to_ptr.vmem [resolvable:$true] %s73
      %76 = dma.hbm_to_vmem [thread:$0]  %s7, 16, %s74, [#allocation9]
    $region33: #{tpu_custom_call.1} parent=1 // pred_fallthru
      _
    // Predicated region
    $region34: #{tpu_custom_call.1} parent=1 // pred_check
      _
    $region35: #{tpu_custom_call.1} parent=1 // pred_check_branch
      %78 = sbr.rel (0) target = $region37
    $region36: #{tpu_custom_call.1} parent=1 // pred_region
      %s80 = ssub.s32 768, 768
      %81 = vsyncadd [#allocation9], %s80
      %s82 = sshll.u32 [#allocation10], 4
      %s83 = int_to_ptr.vmem [resolvable:$true] %s82
      %88 = dma.hbm_to_vmem [thread:$0]  %s8, 768, %s83, [#allocation9], 256, 256, 16
    $region37: #{tpu_custom_call.1} parent=1 // pred_fallthru
      _
    // Predicated region
    $region38: #{tpu_custom_call.1} parent=1 // pred_check
      _
    $region39: #{tpu_custom_call.1} parent=1 // pred_check_branch
      %90 = sbr.rel (0) target = $region41
    $region40: #{tpu_custom_call.1} parent=1 // pred_region
      _
    $region41: #{tpu_custom_call.1} parent=1 // pred_fallthru
      _
    // Predicated region
    $region42: #{tpu_custom_call.1} parent=1 // pred_check
      _
    $region43: #{tpu_custom_call.1} parent=1 // pred_check_branch
      %92 = sbr.rel (0) target = $region45
    $region44: #{tpu_custom_call.1} parent=1 // pred_region
      _
    $region45: #{tpu_custom_call.1} parent=1 // pred_fallthru
      _
    // Predicated region
    $region46: #{tpu_custom_call.1} parent=1 // pred_check
      _
    $region47: #{tpu_custom_call.1} parent=1 // pred_check_branch
      %94 = sbr.rel (0) target = $region49
    $region48: #{tpu_custom_call.1} parent=1 // pred_region
      %s96 = ssub.s32 8192, 8192
      %97 = vsyncadd [#allocation12], %s96
      %s98 = sshll.u32 [#allocation11], 4
      %s99 = int_to_ptr.vmem [resolvable:$true] %s98
      %104 = dma.hbm_to_vmem [thread:$0]  %s11, 8192, %s99, [#allocation12], 256, 256, 16
    $region49: #{tpu_custom_call.1} parent=1 // pred_fallthru
      _
    // Predicated region
    $region50: #{tpu_custom_call.1} parent=1 // pred_check
      _
    $region51: #{tpu_custom_call.1} parent=1 // pred_check_branch
      %106 = sbr.rel (0) target = $region53
    $region52: #{tpu_custom_call.1} parent=1 // pred_region
      _
    $region53: #{tpu_custom_call.1} parent=1 // pred_fallthru
      _
    // Predicated region
    $region54: #{tpu_custom_call.1} parent=1 // pred_check
      _
    $region55: #{tpu_custom_call.1} parent=1 // pred_check_branch
      %108 = sbr.rel (0) target = $region57
    $region56: #{tpu_custom_call.1} parent=1 // pred_region
      _
    $region57: #{tpu_custom_call.1} parent=1 // pred_fallthru
      _
    // Predicated region
    $region58: #{tpu_custom_call.1} parent=1 // pred_check
      _
    $region59: #{tpu_custom_call.1} parent=1 // pred_check_branch
      %110 = sbr.rel (0) target = $region61
    $region60: #{tpu_custom_call.1} parent=1 // pred_region
      _
    $region61: #{tpu_custom_call.1} parent=1 // pred_fallthru
      _
    // Predicated region
    $region62: #{tpu_custom_call.1} parent=1 // pred_check
      _
    $region63: #{tpu_custom_call.1} parent=1 // pred_check_branch
      %112 = sbr.rel (0) target = $region65
    $region64: #{tpu_custom_call.1} parent=1 // pred_region
      %113 = dma.done [#allocation3], 32
    $region65: #{tpu_custom_call.1} parent=1 // pred_fallthru
      _
    // Predicated region
    $region66: #{tpu_custom_call.1} parent=1 // pred_check
      _
    $region67: #{tpu_custom_call.1} parent=1 // pred_check_branch
      %115 = sbr.rel (0) target = $region69
    $region68: #{tpu_custom_call.1} parent=1 // pred_region
      %116 = dma.done [#allocation6], 32
    $region69: #{tpu_custom_call.1} parent=1 // pred_fallthru
      _
    // Predicated region
    $region70: #{tpu_custom_call.1} parent=1 // pred_check
      _
    $region71: #{tpu_custom_call.1} parent=1 // pred_check_branch
      %118 = sbr.rel (0) target = $region73
    $region72: #{tpu_custom_call.1} parent=1 // pred_region
      %119 = dma.done [#allocation6], 32
    $region73: #{tpu_custom_call.1} parent=1 // pred_fallthru
      _
    // Predicated region
    $region74: #{tpu_custom_call.1} parent=1 // pred_check
      _
    $region75: #{tpu_custom_call.1} parent=1 // pred_check_branch
      %121 = sbr.rel (0) target = $region77
    $region76: #{tpu_custom_call.1} parent=1 // pred_region
      %122 = dma.done [#allocation9], 16
    $region77: #{tpu_custom_call.1} parent=1 // pred_fallthru
      _
    // Predicated region
    $region78: #{tpu_custom_call.1} parent=1 // pred_check
      _
    $region79: #{tpu_custom_call.1} parent=1 // pred_check_branch
      %124 = sbr.rel (0) target = $region81
    $region80: #{tpu_custom_call.1} parent=1 // pred_region
      %125 = dma.done [#allocation9], 768
    $region81: #{tpu_custom_call.1} parent=1 // pred_fallthru
      _
    // Predicated region
    $region82: #{tpu_custom_call.1} parent=1 // pred_check
      _
    $region83: #{tpu_custom_call.1} parent=1 // pred_check_branch
      %127 = sbr.rel (0) target = $region85
    $region84: #{tpu_custom_call.1} parent=1 // pred_region
      %128 = dma.done [#allocation12], 8192
    $region85: #{tpu_custom_call.1} parent=1 // pred_fallthru
      _
    %v129 = vld [vmem:[%s0] sm:$0x3]
    %v130 = vld [vmem:[%s2] sm:$0xff]
    %v131 = vld [vmem:[%s2 + $0x8] sm:$0xff]
    %v132 = vld [vmem:[%s2 + $0x10] sm:$0xff]
    %v133 = vld [vmem:[%s2 + $0x18] sm:$0xff]
    %v134 = vld [vmem:[%s2 + $0x20] sm:$0xf]
    %v135 = vld [vmem:[%s2 + $0x28] sm:$0xf]
    %v136 = vld [vmem:[#allocation5] sm:$0x3]
    %v138 = vlaneseq
    %v139 = vshrl.u32 %v138, 7
    %v140 = vsub.s32 0, %v139
    %v141 = vrot.slane %v136, %v140
    %v142 = vlaneseq
    %v143 = vshrl.u32 %v142, 7
    %v144 = vsub.s32 1, %v143
    %v145 = vrot.slane %v136, %v144
    %vm148 = vcmask 162816
    %v150 = vsel %vm148, %v129, 0
    %vm152 = vcmask 1043456
    %v154 = vsel %vm152, %v134, 0
    %v157 = vsel %vm152, %v135, 0
    %159 = vmatprep.subr.mxu0 %v131
    %160 = vmatpush1.msra.mxu0 %v130
    %161 = vmatprep.subr.mxu0 %v133
    %162 = vmatpush1.msra.mxu0 %v132
    %163 = vmatprep.subr.mxu0 %v157
    %164 = vmatpush1.msra.mxu0 %v154
    %165 = vmatprep.subr.mxu0 0.0
    %166 = vmatpush1.msra.mxu0 0.0
    %167 = vmatprep.subr.mxu0 0.0
    %168 = vmatpush1.msra.mxu0 0.0
    %169 = vmatprep.subr.mxu0 0.0
    %170 = vmatpush1.msra.mxu0 0.0
    %171 = vmatprep.subr.mxu0 0.0
    %172 = vmatpush1.msra.mxu0 0.0
    %173 = vmatprep.subr.mxu0 0.0
    %174 = vmatpush1.msra.mxu0 0.0
    %175 = vmatprep.subr.mxu0 0.0
    %176 = vmatpush1.msra.mxu0 0.0
    %177 = vmatprep.subr.mxu0 0.0
    %178 = vmatpush1.msra.mxu0 0.0
    %179 = vmatprep.subr.mxu0 0.0
    %180 = vmatpush1.msra.mxu0 0.0
    %181 = vmatprep.subr.mxu0 0.0
    %182 = vmatpush1.msra.mxu0 0.0
    %183 = vmatprep.subr.mxu0 0.0
    %184 = vmatpush1.msra.mxu0 0.0
    %185 = vmatprep.subr.mxu0 0.0
    %186 = vmatpush1.msra.mxu0 0.0
    %187 = vmatprep.subr.mxu0 0.0
    %188 = vmatpush1.msra.mxu0 0.0
    %189 = vmatprep.subr.mxu0 0.0
    %190 = vmatpush1.msra.mxu0 0.0
    %191 = vmatprep.subr.mxu0 0.0
    %192 = vmatpush1.msra.mxu0 0.0
    %193 = vmatprep.subr.mxu0 0.0
    %194 = vmatpush1.msra.mxu0 0.0
    %195 = vmatprep.subr.mxu0 0.0
    %196 = vmatpush1.msra.mxu0 0.0
    %197 = vmatprep.subr.mxu0 0.0
    %198 = vmatpush1.msra.mxu0 0.0
    %199 = vmatprep.subr.mxu0 0.0
    %200 = vmatpush1.msra.mxu0 0.0
    %201 = vmatprep.subr.mxu0 0.0
    %202 = vmatpush1.msra.mxu0 0.0
    %203 = vmatprep.subr.mxu0 0.0
    %204 = vmatpush1.msra.mxu0 0.0
    %205 = vmatprep.subr.mxu0 0.0
    %206 = vmatpush1.msra.mxu0 0.0
    %207 = vmatprep.subr.mxu0 0.0
    %208 = vmatpush1.msra.mxu0 0.0
    %209 = vmatprep.subr.mxu0 0.0
    %210 = vmatpush1.msra.mxu0 0.0
    %211 = vmatprep.subr.mxu0 0.0
    %212 = vmatpush1.msra.mxu0 0.0
    %213 = vmatprep.subr.mxu0 0.0
    %214 = vmatpush1.msra.mxu0 0.0
    %215 = vmatprep.subr.mxu0 0.0
    %216 = vmatpush1.msra.mxu0 0.0
    %217 = vmatprep.subr.mxu0 0.0
    %218 = vmatpush1.msra.mxu0 0.0
    %219 = vmatprep.subr.mxu0 0.0
    %220 = vmatpush1.msra.mxu0 0.0
    %221 = vmatprep.subr.mxu0 0.0
    %222 = vmatpush1.msra.mxu0 0.0
    %223 = vmatprep.mubr.f32.mxu0 0.0
    %224 = vmatmul.mubr.f32.gmra.mrb[0].mxu0 %v150
    %v225 = vpop.f32.mrb[0].mxu0
    %v226 = vadd.f32 %v141, %v225
    %v227 = vpop.f32.mrb[0].mxu0
    %v228 = vadd.f32 %v145, %v227
    %229 = vdwg.mxu0
    %v230 = vmax.f32 %v226, 0.0
    %v231 = vmax.f32 %v228, 0.0
    %v232 = vld [vmem:[%s4] sm:$0xff]
    %v233 = vld [vmem:[%s4 + $0x8] sm:$0xff]
    %v234 = vld [vmem:[%s4 + $0x10] sm:$0xff]
    %v235 = vld [vmem:[%s4 + $0x18] sm:$0xff]
    %v236 = vld [vmem:[%s4 + $0x20] sm:$0xff]
    %v237 = vld [vmem:[%s4 + $0x28] sm:$0xff]
    %v238 = vld [vmem:[%s4 + $0x30] sm:$0xff]
    %v239 = vld [vmem:[%s4 + $0x38] sm:$0xff]
    %v240 = vld [vmem:[%s4 + $0x40] sm:$0xff]
    %v241 = vld [vmem:[%s4 + $0x48] sm:$0xff]
    %v242 = vld [vmem:[%s4 + $0x50] sm:$0xff]
    %v243 = vld [vmem:[%s4 + $0x58] sm:$0xff]
    %v244 = vld [vmem:[%s4 + $0x60] sm:$0xff]
    %v245 = vld [vmem:[%s4 + $0x68] sm:$0xff]
    %v246 = vld [vmem:[%s4 + $0x70] sm:$0xff]
    %v247 = vld [vmem:[%s4 + $0x78] sm:$0xff]
    %v248 = vld [vmem:[%s4 + $0x80] sm:$0xff]
    %v249 = vld [vmem:[%s4 + $0x88] sm:$0xff]
    %v250 = vld [vmem:[%s4 + $0x90] sm:$0xff]
    %v251 = vld [vmem:[%s4 + $0x98] sm:$0xff]
    %v252 = vld [vmem:[%s4 + $0xa0] sm:$0xff]
    %v253 = vld [vmem:[%s4 + $0xa8] sm:$0xff]
    %v254 = vld [vmem:[%s4 + $0xb0] sm:$0xff]
    %v255 = vld [vmem:[%s4 + $0xb8] sm:$0xff]
    %v256 = vld [vmem:[%s4 + $0xc0] sm:$0xff]
    %v257 = vld [vmem:[%s4 + $0xc8] sm:$0xff]
    %v258 = vld [vmem:[%s4 + $0xd0] sm:$0xff]
    %v259 = vld [vmem:[%s4 + $0xd8] sm:$0xff]
    %v260 = vld [vmem:[%s4 + $0xe0] sm:$0xff]
    %v261 = vld [vmem:[%s4 + $0xe8] sm:$0xff]
    %v262 = vld [vmem:[%s4 + $0xf0] sm:$0xff]
    %v263 = vld [vmem:[%s4 + $0xf8] sm:$0xff]
    %v264 = vld [vmem:[%s4 + $0x100] sm:$0xff]
    %v265 = vld [vmem:[%s4 + $0x108] sm:$0xff]
    %v266 = vld [vmem:[%s4 + $0x110] sm:$0xff]
    %v267 = vld [vmem:[%s4 + $0x118] sm:$0xff]
    %v268 = vld [vmem:[%s4 + $0x120] sm:$0xff]
    %v269 = vld [vmem:[%s4 + $0x128] sm:$0xff]
    %v270 = vld [vmem:[%s4 + $0x130] sm:$0xff]
    %v271 = vld [vmem:[%s4 + $0x138] sm:$0xff]
    %v272 = vld [vmem:[%s4 + $0x140] sm:$0xff]
    %v273 = vld [vmem:[%s4 + $0x148] sm:$0xff]
    %v274 = vld [vmem:[%s4 + $0x150] sm:$0xff]
    %v275 = vld [vmem:[%s4 + $0x158] sm:$0xff]
    %v276 = vld [vmem:[%s4 + $0x160] sm:$0xff]
    %v277 = vld [vmem:[%s4 + $0x168] sm:$0xff]
    %v278 = vld [vmem:[%s4 + $0x170] sm:$0xff]
    %v279 = vld [vmem:[%s4 + $0x178] sm:$0xff]
    %v280 = vld [vmem:[%s4 + $0x180] sm:$0xff]
    %v281 = vld [vmem:[%s4 + $0x188] sm:$0xff]
    %v282 = vld [vmem:[%s4 + $0x190] sm:$0xff]
    %v283 = vld [vmem:[%s4 + $0x198] sm:$0xff]
    %v284 = vld [vmem:[%s4 + $0x1a0] sm:$0xff]
    %v285 = vld [vmem:[%s4 + $0x1a8] sm:$0xff]
    %v286 = vld [vmem:[%s4 + $0x1b0] sm:$0xff]
    %v287 = vld [vmem:[%s4 + $0x1b8] sm:$0xff]
    %v288 = vld [vmem:[%s4 + $0x1c0] sm:$0xff]
    %v289 = vld [vmem:[%s4 + $0x1c8] sm:$0xff]
    %v290 = vld [vmem:[%s4 + $0x1d0] sm:$0xff]
    %v291 = vld [vmem:[%s4 + $0x1d8] sm:$0xff]
    %v292 = vld [vmem:[%s4 + $0x1e0] sm:$0xff]
    %v293 = vld [vmem:[%s4 + $0x1e8] sm:$0xff]
    %v294 = vld [vmem:[%s4 + $0x1f0] sm:$0xff]
    %v295 = vld [vmem:[%s4 + $0x1f8] sm:$0xff]
    %v296 = vld [vmem:[#allocation7] sm:$0x3]
    %v298 = vlaneseq
    %v299 = vshrl.u32 %v298, 7
    %v300 = vsub.s32 0, %v299
    %v301 = vrot.slane %v296, %v300
    %v302 = vlaneseq
    %v303 = vshrl.u32 %v302, 7
    %v304 = vsub.s32 1, %v303
    %v305 = vrot.slane %v296, %v304
    %308 = vmatprep.subr.mxu0 %v233
    %309 = vmatpush1.msra.mxu0 %v232
    %310 = vmatprep.subr.mxu0 %v235
    %311 = vmatpush1.msra.mxu0 %v234
    %312 = vmatprep.subr.mxu0 %v237
    %313 = vmatpush1.msra.mxu0 %v236
    %314 = vmatprep.subr.mxu0 %v239
    %315 = vmatpush1.msra.mxu0 %v238
    %316 = vmatprep.subr.mxu0 %v241
    %317 = vmatpush1.msra.mxu0 %v240
    %318 = vmatprep.subr.mxu0 %v243
    %319 = vmatpush1.msra.mxu0 %v242
    %320 = vmatprep.subr.mxu0 %v245
    %321 = vmatpush1.msra.mxu0 %v244
    %322 = vmatprep.subr.mxu0 %v247
    %323 = vmatpush1.msra.mxu0 %v246
    %324 = vmatprep.subr.mxu0 %v249
    %325 = vmatpush1.msra.mxu0 %v248
    %326 = vmatprep.subr.mxu0 %v251
    %327 = vmatpush1.msra.mxu0 %v250
    %328 = vmatprep.subr.mxu0 %v253
    %329 = vmatpush1.msra.mxu0 %v252
    %330 = vmatprep.subr.mxu0 %v255
    %331 = vmatpush1.msra.mxu0 %v254
    %332 = vmatprep.subr.mxu0 %v257
    %333 = vmatpush1.msra.mxu0 %v256
    %334 = vmatprep.subr.mxu0 %v259
    %335 = vmatpush1.msra.mxu0 %v258
    %336 = vmatprep.subr.mxu0 %v261
    %337 = vmatpush1.msra.mxu0 %v260
    %338 = vmatprep.subr.mxu0 %v263
    %339 = vmatpush1.msra.mxu0 %v262
    %340 = vmatprep.subr.mxu0 %v265
    %341 = vmatpush1.msra.mxu0 %v264
    %342 = vmatprep.subr.mxu0 %v267
    %343 = vmatpush1.msra.mxu0 %v266
    %344 = vmatprep.subr.mxu0 %v269
    %345 = vmatpush1.msra.mxu0 %v268
    %346 = vmatprep.subr.mxu0 %v271
    %347 = vmatpush1.msra.mxu0 %v270
    %348 = vmatprep.subr.mxu0 %v273
    %349 = vmatpush1.msra.mxu0 %v272
    %350 = vmatprep.subr.mxu0 %v275
    %351 = vmatpush1.msra.mxu0 %v274
    %352 = vmatprep.subr.mxu0 %v277
    %353 = vmatpush1.msra.mxu0 %v276
    %354 = vmatprep.subr.mxu0 %v279
    %355 = vmatpush1.msra.mxu0 %v278
    %356 = vmatprep.subr.mxu0 %v281
    %357 = vmatpush1.msra.mxu0 %v280
    %358 = vmatprep.subr.mxu0 %v283
    %359 = vmatpush1.msra.mxu0 %v282
    %360 = vmatprep.subr.mxu0 %v285
    %361 = vmatpush1.msra.mxu0 %v284
    %362 = vmatprep.subr.mxu0 %v287
    %363 = vmatpush1.msra.mxu0 %v286
    %364 = vmatprep.subr.mxu0 %v289
    %365 = vmatpush1.msra.mxu0 %v288
    %366 = vmatprep.subr.mxu0 %v291
    %367 = vmatpush1.msra.mxu0 %v290
    %368 = vmatprep.subr.mxu0 %v293
    %369 = vmatpush1.msra.mxu0 %v292
    %370 = vmatprep.subr.mxu0 %v295
    %371 = vmatpush1.msra.mxu0 %v294
    %372 = vmatprep.mubr.f32.mxu0 %v231
    %373 = vmatmul.mubr.f32.gmra.mrb[0].mxu0 %v230
    %v374 = vpop.f32.mrb[0].mxu0
    %v375 = vadd.f32 %v301, %v374
    %v376 = vpop.f32.mrb[0].mxu0
    %v377 = vadd.f32 %v305, %v376
    %378 = vdwg.mxu0
    %v379 = vmax.f32 %v375, 0.0
    %v380 = vmax.f32 %v377, 0.0
    %v381 = vld [vmem:[%s6] sm:$0xff]
    %v382 = vld [vmem:[%s6 + $0x8] sm:$0xff]
    %v383 = vld [vmem:[%s6 + $0x10] sm:$0xff]
    %v384 = vld [vmem:[%s6 + $0x18] sm:$0xff]
    %v385 = vld [vmem:[%s6 + $0x20] sm:$0xff]
    %v386 = vld [vmem:[%s6 + $0x28] sm:$0xff]
    %v387 = vld [vmem:[%s6 + $0x30] sm:$0xff]
    %v388 = vld [vmem:[%s6 + $0x38] sm:$0xff]
    %v389 = vld [vmem:[%s6 + $0x40] sm:$0xff]
    %v390 = vld [vmem:[%s6 + $0x48] sm:$0xff]
    %v391 = vld [vmem:[%s6 + $0x50] sm:$0xff]
    %v392 = vld [vmem:[%s6 + $0x58] sm:$0xff]
    %v393 = vld [vmem:[%s6 + $0x60] sm:$0xff]
    %v394 = vld [vmem:[%s6 + $0x68] sm:$0xff]
    %v395 = vld [vmem:[%s6 + $0x70] sm:$0xff]
    %v396 = vld [vmem:[%s6 + $0x78] sm:$0xff]
    %v397 = vld [vmem:[%s6 + $0x80] sm:$0xff]
    %v398 = vld [vmem:[%s6 + $0x88] sm:$0xff]
    %v399 = vld [vmem:[%s6 + $0x90] sm:$0xff]
    %v400 = vld [vmem:[%s6 + $0x98] sm:$0xff]
    %v401 = vld [vmem:[%s6 + $0xa0] sm:$0xff]
    %v402 = vld [vmem:[%s6 + $0xa8] sm:$0xff]
    %v403 = vld [vmem:[%s6 + $0xb0] sm:$0xff]
    %v404 = vld [vmem:[%s6 + $0xb8] sm:$0xff]
    %v405 = vld [vmem:[%s6 + $0xc0] sm:$0xff]
    %v406 = vld [vmem:[%s6 + $0xc8] sm:$0xff]
    %v407 = vld [vmem:[%s6 + $0xd0] sm:$0xff]
    %v408 = vld [vmem:[%s6 + $0xd8] sm:$0xff]
    %v409 = vld [vmem:[%s6 + $0xe0] sm:$0xff]
    %v410 = vld [vmem:[%s6 + $0xe8] sm:$0xff]
    %v411 = vld [vmem:[%s6 + $0xf0] sm:$0xff]
    %v412 = vld [vmem:[%s6 + $0xf8] sm:$0xff]
    %v413 = vld [vmem:[#allocation8] sm:$0x1]
    %v415 = vlaneseq
    %v416 = vshrl.u32 %v415, 7
    %v417 = vsub.s32 0, %v416
    %v418 = vrot.slane %v413, %v417
    %420 = vmatprep.subr.mxu0 0.0
    %421 = vmatpush1.msra.mxu0 %v381
    %422 = vmatprep.subr.mxu0 0.0
    %423 = vmatpush1.msra.mxu0 %v382
    %424 = vmatprep.subr.mxu0 0.0
    %425 = vmatpush1.msra.mxu0 %v383
    %426 = vmatprep.subr.mxu0 0.0
    %427 = vmatpush1.msra.mxu0 %v384
    %428 = vmatprep.subr.mxu0 0.0
    %429 = vmatpush1.msra.mxu0 %v385
    %430 = vmatprep.subr.mxu0 0.0
    %431 = vmatpush1.msra.mxu0 %v386
    %432 = vmatprep.subr.mxu0 0.0
    %433 = vmatpush1.msra.mxu0 %v387
    %434 = vmatprep.subr.mxu0 0.0
    %435 = vmatpush1.msra.mxu0 %v388
    %436 = vmatprep.subr.mxu0 0.0
    %437 = vmatpush1.msra.mxu0 %v389
    %438 = vmatprep.subr.mxu0 0.0
    %439 = vmatpush1.msra.mxu0 %v390
    %440 = vmatprep.subr.mxu0 0.0
    %441 = vmatpush1.msra.mxu0 %v391
    %442 = vmatprep.subr.mxu0 0.0
    %443 = vmatpush1.msra.mxu0 %v392
    %444 = vmatprep.subr.mxu0 0.0
    %445 = vmatpush1.msra.mxu0 %v393
    %446 = vmatprep.subr.mxu0 0.0
    %447 = vmatpush1.msra.mxu0 %v394
    %448 = vmatprep.subr.mxu0 0.0
    %449 = vmatpush1.msra.mxu0 %v395
    %450 = vmatprep.subr.mxu0 0.0
    %451 = vmatpush1.msra.mxu0 %v396
    %452 = vmatprep.subr.mxu0 0.0
    %453 = vmatpush1.msra.mxu0 %v397
    %454 = vmatprep.subr.mxu0 0.0
    %455 = vmatpush1.msra.mxu0 %v398
    %456 = vmatprep.subr.mxu0 0.0
    %457 = vmatpush1.msra.mxu0 %v399
    %458 = vmatprep.subr.mxu0 0.0
    %459 = vmatpush1.msra.mxu0 %v400
    %460 = vmatprep.subr.mxu0 0.0
    %461 = vmatpush1.msra.mxu0 %v401
    %462 = vmatprep.subr.mxu0 0.0
    %463 = vmatpush1.msra.mxu0 %v402
    %464 = vmatprep.subr.mxu0 0.0
    %465 = vmatpush1.msra.mxu0 %v403
    %466 = vmatprep.subr.mxu0 0.0
    %467 = vmatpush1.msra.mxu0 %v404
    %468 = vmatprep.subr.mxu0 0.0
    %469 = vmatpush1.msra.mxu0 %v405
    %470 = vmatprep.subr.mxu0 0.0
    %471 = vmatpush1.msra.mxu0 %v406
    %472 = vmatprep.subr.mxu0 0.0
    %473 = vmatpush1.msra.mxu0 %v407
    %474 = vmatprep.subr.mxu0 0.0
    %475 = vmatpush1.msra.mxu0 %v408
    %476 = vmatprep.subr.mxu0 0.0
    %477 = vmatpush1.msra.mxu0 %v409
    %478 = vmatprep.subr.mxu0 0.0
    %479 = vmatpush1.msra.mxu0 %v410
    %480 = vmatprep.subr.mxu0 0.0
    %481 = vmatpush1.msra.mxu0 %v411
    %482 = vmatprep.subr.mxu0 0.0
    %483 = vmatpush1.msra.mxu0 %v412
    %484 = vmatprep.mubr.f32.mxu0 %v380
    %485 = vmatmul.mubr.f32.gmra.mrb[0].mxu0 %v379
    %v486 = vpop.f32.mrb[0].mxu0
    %v487 = vadd.f32 %v418, %v486
    %v488 = vpop.f32.mrb[0].mxu0
    %489 = vdwg.mxu0
    %v490 = vmul.f32 %v487, 0.5
    %v491 = vmul.f32 %v490, 1.442695
    %v492 = vpow.pop %v491
    %v493 = vld [vmem:[#allocation2] sm:$0x3]
    %495 = vrot.lane.b32.xlu0 %v493, 8
    %v496 = vpop.permute.xlu0 %495
    %v498 = vmul.f32 %v492, %v496
    %500 = vrot.lane.b32.xlu0 %v498, 120
    %v501 = vpop.permute.xlu0 %500
    %v503 = vadd.f32 %v487, %v501
    %v504 = vld [vmem:[#allocation10] sm:$0xff]
    %v505 = vld [vmem:[#allocation10 + $0x8] sm:$0xff]
    %v506 = vld [vmem:[#allocation10 + $0x10] sm:$0xff]
    %v507 = vld [vmem:[#allocation10 + $0x18] sm:$0xff]
    %v508 = vld [vmem:[#allocation10 + $0x20] sm:$0xf]
    %v509 = vld [vmem:[#allocation10 + $0x28] sm:$0xf]
    %v510 = vld [vmem:[%s9] sm:$0xff]
    %v511 = vld [vmem:[%s9 + $0x8] sm:$0xff]
    %vm512 = vcmask 64512
    %v514 = vsel %vm512, %v503, 0
    %516 = vmatprep.subr.mxu0 %v511
    %517 = vmatpush1.msra.mxu0 %v510
    %518 = vmatprep.subr.mxu0 0.0
    %519 = vmatpush1.msra.mxu0 0.0
    %520 = vmatprep.subr.mxu0 0.0
    %521 = vmatpush1.msra.mxu0 0.0
    %522 = vmatprep.subr.mxu0 0.0
    %523 = vmatpush1.msra.mxu0 0.0
    %524 = vmatprep.subr.mxu0 0.0
    %525 = vmatpush1.msra.mxu0 0.0
    %526 = vmatprep.subr.mxu0 0.0
    %527 = vmatpush1.msra.mxu0 0.0
    %528 = vmatprep.subr.mxu0 0.0
    %529 = vmatpush1.msra.mxu0 0.0
    %530 = vmatprep.subr.mxu0 0.0
    %531 = vmatpush1.msra.mxu0 0.0
    %532 = vmatprep.subr.mxu0 0.0
    %533 = vmatpush1.msra.mxu0 0.0
    %534 = vmatprep.subr.mxu0 0.0
    %535 = vmatpush1.msra.mxu0 0.0
    %536 = vmatprep.subr.mxu0 0.0
    %537 = vmatpush1.msra.mxu0 0.0
    %538 = vmatprep.subr.mxu0 0.0
    %539 = vmatpush1.msra.mxu0 0.0
    %540 = vmatprep.subr.mxu0 0.0
    %541 = vmatpush1.msra.mxu0 0.0
    %542 = vmatprep.subr.mxu0 0.0
    %543 = vmatpush1.msra.mxu0 0.0
    %544 = vmatprep.subr.mxu0 0.0
    %545 = vmatpush1.msra.mxu0 0.0
    %546 = vmatprep.subr.mxu0 0.0
    %547 = vmatpush1.msra.mxu0 0.0
    %548 = vmatprep.subr.mxu0 0.0
    %549 = vmatpush1.msra.mxu0 0.0
    %550 = vmatprep.subr.mxu0 0.0
    %551 = vmatpush1.msra.mxu0 0.0
    %552 = vmatprep.subr.mxu0 0.0
    %553 = vmatpush1.msra.mxu0 0.0
    %554 = vmatprep.subr.mxu0 0.0
    %555 = vmatpush1.msra.mxu0 0.0
    %556 = vmatprep.subr.mxu0 0.0
    %557 = vmatpush1.msra.mxu0 0.0
    %558 = vmatprep.subr.mxu0 0.0
    %559 = vmatpush1.msra.mxu0 0.0
    %560 = vmatprep.subr.mxu0 0.0
    %561 = vmatpush1.msra.mxu0 0.0
    %562 = vmatprep.subr.mxu0 0.0
    %563 = vmatpush1.msra.mxu0 0.0
    %564 = vmatprep.subr.mxu0 0.0
    %565 = vmatpush1.msra.mxu0 0.0
    %566 = vmatprep.subr.mxu0 0.0
    %567 = vmatpush1.msra.mxu0 0.0
    %568 = vmatprep.subr.mxu0 0.0
    %569 = vmatpush1.msra.mxu0 0.0
    %570 = vmatprep.subr.mxu0 0.0
    %571 = vmatpush1.msra.mxu0 0.0
    %572 = vmatprep.subr.mxu0 0.0
    %573 = vmatpush1.msra.mxu0 0.0
    %574 = vmatprep.subr.mxu0 0.0
    %575 = vmatpush1.msra.mxu0 0.0
    %576 = vmatprep.subr.mxu0 0.0
    %577 = vmatpush1.msra.mxu0 0.0
    %578 = vmatprep.subr.mxu0 0.0
    %579 = vmatpush1.msra.mxu0 0.0
    %580 = vmatprep.mubr.f32.mxu0 0.0
    %581 = vmatmul.mubr.f32.gmra.mrb[0].mxu0 %v514
    %v582 = vpop.f32.mrb[0].mxu0
    %v583 = vadd.f32 0.0, %v582
    %v584 = vpop.f32.mrb[0].mxu0
    %v585 = vadd.f32 0.0, %v584
    %586 = vdwg.mxu0
    %v588 = vsel %vm152, %v508, 0
    %v591 = vsel %vm152, %v509, 0
    %593 = vmatprep.subr.mxu0 %v505
    %594 = vmatpush1.msra.mxu0 %v504
    %595 = vmatprep.subr.mxu0 %v507
    %596 = vmatpush1.msra.mxu0 %v506
    %597 = vmatprep.subr.mxu0 %v591
    %598 = vmatpush1.msra.mxu0 %v588
    %599 = vmatprep.subr.mxu0 0.0
    %600 = vmatpush1.msra.mxu0 0.0
    %601 = vmatprep.subr.mxu0 0.0
    %602 = vmatpush1.msra.mxu0 0.0
    %603 = vmatprep.subr.mxu0 0.0
    %604 = vmatpush1.msra.mxu0 0.0
    %605 = vmatprep.subr.mxu0 0.0
    %606 = vmatpush1.msra.mxu0 0.0
    %607 = vmatprep.subr.mxu0 0.0
    %608 = vmatpush1.msra.mxu0 0.0
    %609 = vmatprep.subr.mxu0 0.0
    %610 = vmatpush1.msra.mxu0 0.0
    %611 = vmatprep.subr.mxu0 0.0
    %612 = vmatpush1.msra.mxu0 0.0
    %613 = vmatprep.subr.mxu0 0.0
    %614 = vmatpush1.msra.mxu0 0.0
    %615 = vmatprep.subr.mxu0 0.0
    %616 = vmatpush1.msra.mxu0 0.0
    %617 = vmatprep.subr.mxu0 0.0
    %618 = vmatpush1.msra.mxu0 0.0
    %619 = vmatprep.subr.mxu0 0.0
    %620 = vmatpush1.msra.mxu0 0.0
    %621 = vmatprep.subr.mxu0 0.0
    %622 = vmatpush1.msra.mxu0 0.0
    %623 = vmatprep.subr.mxu0 0.0
    %624 = vmatpush1.msra.mxu0 0.0
    %625 = vmatprep.subr.mxu0 0.0
    %626 = vmatpush1.msra.mxu0 0.0
    %627 = vmatprep.subr.mxu0 0.0
    %628 = vmatpush1.msra.mxu0 0.0
    %629 = vmatprep.subr.mxu0 0.0
    %630 = vmatpush1.msra.mxu0 0.0
    %631 = vmatprep.subr.mxu0 0.0
    %632 = vmatpush1.msra.mxu0 0.0
    %633 = vmatprep.subr.mxu0 0.0
    %634 = vmatpush1.msra.mxu0 0.0
    %635 = vmatprep.subr.mxu0 0.0
    %636 = vmatpush1.msra.mxu0 0.0
    %637 = vmatprep.subr.mxu0 0.0
    %638 = vmatpush1.msra.mxu0 0.0
    %639 = vmatprep.subr.mxu0 0.0
    %640 = vmatpush1.msra.mxu0 0.0
    %641 = vmatprep.subr.mxu0 0.0
    %642 = vmatpush1.msra.mxu0 0.0
    %643 = vmatprep.subr.mxu0 0.0
    %644 = vmatpush1.msra.mxu0 0.0
    %645 = vmatprep.subr.mxu0 0.0
    %646 = vmatpush1.msra.mxu0 0.0
    %647 = vmatprep.subr.mxu0 0.0
    %648 = vmatpush1.msra.mxu0 0.0
    %649 = vmatprep.subr.mxu0 0.0
    %650 = vmatpush1.msra.mxu0 0.0
    %651 = vmatprep.subr.mxu0 0.0
    %652 = vmatpush1.msra.mxu0 0.0
    %653 = vmatprep.subr.mxu0 0.0
    %654 = vmatpush1.msra.mxu0 0.0
    %655 = vmatprep.subr.mxu0 0.0
    %656 = vmatpush1.msra.mxu0 0.0
    %657 = vmatprep.mubr.f32.mxu0 0.0
    %658 = vmatmul.mubr.f32.gmra.mrb[0].mxu0 %v150
    %v659 = vpop.f32.mrb[0].mxu0
    %v660 = vadd.f32 %v583, %v659
    %v661 = vpop.f32.mrb[0].mxu0
    %v662 = vadd.f32 %v585, %v661
    %663 = vdwg.mxu0
    %v664 = vld [vmem:[%s10] sm:$0x3]
    %v666 = vlaneseq
    %v667 = vshrl.u32 %v666, 7
    %v668 = vsub.s32 0, %v667
    %v669 = vrot.slane %v664, %v668
    %v670 = vlaneseq
    %v671 = vshrl.u32 %v670, 7
    %v672 = vsub.s32 1, %v671
    %v673 = vrot.slane %v664, %v672
    %v676 = vadd.f32 %v660, %v669
    %v677 = vadd.f32 %v662, %v673
    %v678 = vmax.f32 %v676, 0.0
    %v679 = vmax.f32 %v677, 0.0
    %v680 = vld [vmem:[#allocation11] sm:$0xff]
    %v681 = vld [vmem:[#allocation11 + $0x8] sm:$0xff]
    %v682 = vld [vmem:[#allocation11 + $0x10] sm:$0xff]
    %v683 = vld [vmem:[#allocation11 + $0x18] sm:$0xff]
    %v684 = vld [vmem:[#allocation11 + $0x20] sm:$0xff]
    %v685 = vld [vmem:[#allocation11 + $0x28] sm:$0xff]
    %v686 = vld [vmem:[#allocation11 + $0x30] sm:$0xff]
    %v687 = vld [vmem:[#allocation11 + $0x38] sm:$0xff]
    %v688 = vld [vmem:[#allocation11 + $0x40] sm:$0xff]
    %v689 = vld [vmem:[#allocation11 + $0x48] sm:$0xff]
    %v690 = vld [vmem:[#allocation11 + $0x50] sm:$0xff]
    %v691 = vld [vmem:[#allocation11 + $0x58] sm:$0xff]
    %v692 = vld [vmem:[#allocation11 + $0x60] sm:$0xff]
    %v693 = vld [vmem:[#allocation11 + $0x68] sm:$0xff]
    %v694 = vld [vmem:[#allocation11 + $0x70] sm:$0xff]
    %v695 = vld [vmem:[#allocation11 + $0x78] sm:$0xff]
    %v696 = vld [vmem:[#allocation11 + $0x80] sm:$0xff]
    %v697 = vld [vmem:[#allocation11 + $0x88] sm:$0xff]
    %v698 = vld [vmem:[#allocation11 + $0x90] sm:$0xff]
    %v699 = vld [vmem:[#allocation11 + $0x98] sm:$0xff]
    %v700 = vld [vmem:[#allocation11 + $0xa0] sm:$0xff]
    %v701 = vld [vmem:[#allocation11 + $0xa8] sm:$0xff]
    %v702 = vld [vmem:[#allocation11 + $0xb0] sm:$0xff]
    %v703 = vld [vmem:[#allocation11 + $0xb8] sm:$0xff]
    %v704 = vld [vmem:[#allocation11 + $0xc0] sm:$0xff]
    %v705 = vld [vmem:[#allocation11 + $0xc8] sm:$0xff]
    %v706 = vld [vmem:[#allocation11 + $0xd0] sm:$0xff]
    %v707 = vld [vmem:[#allocation11 + $0xd8] sm:$0xff]
    %v708 = vld [vmem:[#allocation11 + $0xe0] sm:$0xff]
    %v709 = vld [vmem:[#allocation11 + $0xe8] sm:$0xff]
    %v710 = vld [vmem:[#allocation11 + $0xf0] sm:$0xff]
    %v711 = vld [vmem:[#allocation11 + $0xf8] sm:$0xff]
    %v712 = vld [vmem:[#allocation11 + $0x100] sm:$0xff]
    %v713 = vld [vmem:[#allocation11 + $0x108] sm:$0xff]
    %v714 = vld [vmem:[#allocation11 + $0x110] sm:$0xff]
    %v715 = vld [vmem:[#allocation11 + $0x118] sm:$0xff]
    %v716 = vld [vmem:[#allocation11 + $0x120] sm:$0xff]
    %v717 = vld [vmem:[#allocation11 + $0x128] sm:$0xff]
    %v718 = vld [vmem:[#allocation11 + $0x130] sm:$0xff]
    %v719 = vld [vmem:[#allocation11 + $0x138] sm:$0xff]
    %v720 = vld [vmem:[#allocation11 + $0x140] sm:$0xff]
    %v721 = vld [vmem:[#allocation11 + $0x148] sm:$0xff]
    %v722 = vld [vmem:[#allocation11 + $0x150] sm:$0xff]
    %v723 = vld [vmem:[#allocation11 + $0x158] sm:$0xff]
    %v724 = vld [vmem:[#allocation11 + $0x160] sm:$0xff]
    %v725 = vld [vmem:[#allocation11 + $0x168] sm:$0xff]
    %v726 = vld [vmem:[#allocation11 + $0x170] sm:$0xff]
    %v727 = vld [vmem:[#allocation11 + $0x178] sm:$0xff]
    %v728 = vld [vmem:[#allocation11 + $0x180] sm:$0xff]
    %v729 = vld [vmem:[#allocation11 + $0x188] sm:$0xff]
    %v730 = vld [vmem:[#allocation11 + $0x190] sm:$0xff]
    %v731 = vld [vmem:[#allocation11 + $0x198] sm:$0xff]
    %v732 = vld [vmem:[#allocation11 + $0x1a0] sm:$0xff]
    %v733 = vld [vmem:[#allocation11 + $0x1a8] sm:$0xff]
    %v734 = vld [vmem:[#allocation11 + $0x1b0] sm:$0xff]
    %v735 = vld [vmem:[#allocation11 + $0x1b8] sm:$0xff]
    %v736 = vld [vmem:[#allocation11 + $0x1c0] sm:$0xff]
    %v737 = vld [vmem:[#allocation11 + $0x1c8] sm:$0xff]
    %v738 = vld [vmem:[#allocation11 + $0x1d0] sm:$0xff]
    %v739 = vld [vmem:[#allocation11 + $0x1d8] sm:$0xff]
    %v740 = vld [vmem:[#allocation11 + $0x1e0] sm:$0xff]
    %v741 = vld [vmem:[#allocation11 + $0x1e8] sm:$0xff]
    %v742 = vld [vmem:[#allocation11 + $0x1f0] sm:$0xff]
    %v743 = vld [vmem:[#allocation11 + $0x1f8] sm:$0xff]
    %v744 = vld [vmem:[%s12] sm:$0x3]
    %v746 = vlaneseq
    %v747 = vshrl.u32 %v746, 7
    %v748 = vsub.s32 0, %v747
    %v749 = vrot.slane %v744, %v748
    %v750 = vlaneseq
    %v751 = vshrl.u32 %v750, 7
    %v752 = vsub.s32 1, %v751
    %v753 = vrot.slane %v744, %v752
    %756 = vmatprep.subr.mxu0 %v681
    %757 = vmatpush1.msra.mxu0 %v680
    %758 = vmatprep.subr.mxu0 %v683
    %759 = vmatpush1.msra.mxu0 %v682
    %760 = vmatprep.subr.mxu0 %v685
    %761 = vmatpush1.msra.mxu0 %v684
    %762 = vmatprep.subr.mxu0 %v687
    %763 = vmatpush1.msra.mxu0 %v686
    %764 = vmatprep.subr.mxu0 %v689
    %765 = vmatpush1.msra.mxu0 %v688
    %766 = vmatprep.subr.mxu0 %v691
    %767 = vmatpush1.msra.mxu0 %v690
    %768 = vmatprep.subr.mxu0 %v693
    %769 = vmatpush1.msra.mxu0 %v692
    %770 = vmatprep.subr.mxu0 %v695
    %771 = vmatpush1.msra.mxu0 %v694
    %772 = vmatprep.subr.mxu0 %v697
    %773 = vmatpush1.msra.mxu0 %v696
    %774 = vmatprep.subr.mxu0 %v699
    %775 = vmatpush1.msra.mxu0 %v698
    %776 = vmatprep.subr.mxu0 %v701
    %777 = vmatpush1.msra.mxu0 %v700
    %778 = vmatprep.subr.mxu0 %v703
    %779 = vmatpush1.msra.mxu0 %v702
    %780 = vmatprep.subr.mxu0 %v705
    %781 = vmatpush1.msra.mxu0 %v704
    %782 = vmatprep.subr.mxu0 %v707
    %783 = vmatpush1.msra.mxu0 %v706
    %784 = vmatprep.subr.mxu0 %v709
    %785 = vmatpush1.msra.mxu0 %v708
    %786 = vmatprep.subr.mxu0 %v711
    %787 = vmatpush1.msra.mxu0 %v710
    %788 = vmatprep.subr.mxu0 %v713
    %789 = vmatpush1.msra.mxu0 %v712
    %790 = vmatprep.subr.mxu0 %v715
    %791 = vmatpush1.msra.mxu0 %v714
    %792 = vmatprep.subr.mxu0 %v717
    %793 = vmatpush1.msra.mxu0 %v716
    %794 = vmatprep.subr.mxu0 %v719
    %795 = vmatpush1.msra.mxu0 %v718
    %796 = vmatprep.subr.mxu0 %v721
    %797 = vmatpush1.msra.mxu0 %v720
    %798 = vmatprep.subr.mxu0 %v723
    %799 = vmatpush1.msra.mxu0 %v722
    %800 = vmatprep.subr.mxu0 %v725
    %801 = vmatpush1.msra.mxu0 %v724
    %802 = vmatprep.subr.mxu0 %v727
    %803 = vmatpush1.msra.mxu0 %v726
    %804 = vmatprep.subr.mxu0 %v729
    %805 = vmatpush1.msra.mxu0 %v728
    %806 = vmatprep.subr.mxu0 %v731
    %807 = vmatpush1.msra.mxu0 %v730
    %808 = vmatprep.subr.mxu0 %v733
    %809 = vmatpush1.msra.mxu0 %v732
    %810 = vmatprep.subr.mxu0 %v735
    %811 = vmatpush1.msra.mxu0 %v734
    %812 = vmatprep.subr.mxu0 %v737
    %813 = vmatpush1.msra.mxu0 %v736
    %814 = vmatprep.subr.mxu0 %v739
    %815 = vmatpush1.msra.mxu0 %v738
    %816 = vmatprep.subr.mxu0 %v741
    %817 = vmatpush1.msra.mxu0 %v740
    %818 = vmatprep.subr.mxu0 %v743
    %819 = vmatpush1.msra.mxu0 %v742
    %820 = vmatprep.mubr.f32.mxu0 %v679
    %821 = vmatmul.mubr.f32.gmra.mrb[0].mxu0 %v678
    %v822 = vpop.f32.mrb[0].mxu0
    %v823 = vadd.f32 %v749, %v822
    %v824 = vpop.f32.mrb[0].mxu0
    %v825 = vadd.f32 %v753, %v824
    %826 = vdwg.mxu0
    %v827 = vmax.f32 %v823, 0.0
    %v828 = vmax.f32 %v825, 0.0
    %v829 = vld [vmem:[%s13] sm:$0xff]
    %v830 = vld [vmem:[%s13 + $0x8] sm:$0xff]
    %v831 = vld [vmem:[%s13 + $0x10] sm:$0xff]
    %v832 = vld [vmem:[%s13 + $0x18] sm:$0xff]
    %v833 = vld [vmem:[%s13 + $0x20] sm:$0xff]
    %v834 = vld [vmem:[%s13 + $0x28] sm:$0xff]
    %v835 = vld [vmem:[%s13 + $0x30] sm:$0xff]
    %v836 = vld [vmem:[%s13 + $0x38] sm:$0xff]
    %v837 = vld [vmem:[%s13 + $0x40] sm:$0xff]
    %v838 = vld [vmem:[%s13 + $0x48] sm:$0xff]
    %v839 = vld [vmem:[%s13 + $0x50] sm:$0xff]
    %v840 = vld [vmem:[%s13 + $0x58] sm:$0xff]
    %v841 = vld [vmem:[%s13 + $0x60] sm:$0xff]
    %v842 = vld [vmem:[%s13 + $0x68] sm:$0xff]
    %v843 = vld [vmem:[%s13 + $0x70] sm:$0xff]
    %v844 = vld [vmem:[%s13 + $0x78] sm:$0xff]
    %v845 = vld [vmem:[%s13 + $0x80] sm:$0xff]
    %v846 = vld [vmem:[%s13 + $0x88] sm:$0xff]
    %v847 = vld [vmem:[%s13 + $0x90] sm:$0xff]
    %v848 = vld [vmem:[%s13 + $0x98] sm:$0xff]
    %v849 = vld [vmem:[%s13 + $0xa0] sm:$0xff]
    %v850 = vld [vmem:[%s13 + $0xa8] sm:$0xff]
    %v851 = vld [vmem:[%s13 + $0xb0] sm:$0xff]
    %v852 = vld [vmem:[%s13 + $0xb8] sm:$0xff]
    %v853 = vld [vmem:[%s13 + $0xc0] sm:$0xff]
    %v854 = vld [vmem:[%s13 + $0xc8] sm:$0xff]
    %v855 = vld [vmem:[%s13 + $0xd0] sm:$0xff]
    %v856 = vld [vmem:[%s13 + $0xd8] sm:$0xff]
    %v857 = vld [vmem:[%s13 + $0xe0] sm:$0xff]
    %v858 = vld [vmem:[%s13 + $0xe8] sm:$0xff]
    %v859 = vld [vmem:[%s13 + $0xf0] sm:$0xff]
    %v860 = vld [vmem:[%s13 + $0xf8] sm:$0xff]
    %v861 = vld [vmem:[%s14] sm:$0x1]
    %v863 = vlaneseq
    %v864 = vshrl.u32 %v863, 7
    %v865 = vsub.s32 0, %v864
    %v866 = vrot.slane %v861, %v865
    %868 = vmatprep.subr.mxu0 0.0
    %869 = vmatpush1.msra.mxu0 %v829
    %870 = vmatprep.subr.mxu0 0.0
    %871 = vmatpush1.msra.mxu0 %v830
    %872 = vmatprep.subr.mxu0 0.0
    %873 = vmatpush1.msra.mxu0 %v831
    %874 = vmatprep.subr.mxu0 0.0
    %875 = vmatpush1.msra.mxu0 %v832
    %876 = vmatprep.subr.mxu0 0.0
    %877 = vmatpush1.msra.mxu0 %v833
    %878 = vmatprep.subr.mxu0 0.0
    %879 = vmatpush1.msra.mxu0 %v834
    %880 = vmatprep.subr.mxu0 0.0
    %881 = vmatpush1.msra.mxu0 %v835
    %882 = vmatprep.subr.mxu0 0.0
    %883 = vmatpush1.msra.mxu0 %v836
    %884 = vmatprep.subr.mxu0 0.0
    %885 = vmatpush1.msra.mxu0 %v837
    %886 = vmatprep.subr.mxu0 0.0
    %887 = vmatpush1.msra.mxu0 %v838
    %888 = vmatprep.subr.mxu0 0.0
    %889 = vmatpush1.msra.mxu0 %v839
    %890 = vmatprep.subr.mxu0 0.0
    %891 = vmatpush1.msra.mxu0 %v840
    %892 = vmatprep.subr.mxu0 0.0
    %893 = vmatpush1.msra.mxu0 %v841
    %894 = vmatprep.subr.mxu0 0.0
    %895 = vmatpush1.msra.mxu0 %v842
    %896 = vmatprep.subr.mxu0 0.0
    %897 = vmatpush1.msra.mxu0 %v843
    %898 = vmatprep.subr.mxu0 0.0
    %899 = vmatpush1.msra.mxu0 %v844
    %900 = vmatprep.subr.mxu0 0.0
    %901 = vmatpush1.msra.mxu0 %v845
    %902 = vmatprep.subr.mxu0 0.0
    %903 = vmatpush1.msra.mxu0 %v846
    %904 = vmatprep.subr.mxu0 0.0
    %905 = vmatpush1.msra.mxu0 %v847
    %906 = vmatprep.subr.mxu0 0.0
    %907 = vmatpush1.msra.mxu0 %v848
    %908 = vmatprep.subr.mxu0 0.0
    %909 = vmatpush1.msra.mxu0 %v849
    %910 = vmatprep.subr.mxu0 0.0
    %911 = vmatpush1.msra.mxu0 %v850
    %912 = vmatprep.subr.mxu0 0.0
    %913 = vmatpush1.msra.mxu0 %v851
    %914 = vmatprep.subr.mxu0 0.0
    %915 = vmatpush1.msra.mxu0 %v852
    %916 = vmatprep.subr.mxu0 0.0
    %917 = vmatpush1.msra.mxu0 %v853
    %918 = vmatprep.subr.mxu0 0.0
    %919 = vmatpush1.msra.mxu0 %v854
    %920 = vmatprep.subr.mxu0 0.0
    %921 = vmatpush1.msra.mxu0 %v855
    %922 = vmatprep.subr.mxu0 0.0
    %923 = vmatpush1.msra.mxu0 %v856
    %924 = vmatprep.subr.mxu0 0.0
    %925 = vmatpush1.msra.mxu0 %v857
    %926 = vmatprep.subr.mxu0 0.0
    %927 = vmatpush1.msra.mxu0 %v858
    %928 = vmatprep.subr.mxu0 0.0
    %929 = vmatpush1.msra.mxu0 %v859
    %930 = vmatprep.subr.mxu0 0.0
    %931 = vmatpush1.msra.mxu0 %v860
    %932 = vmatprep.mubr.f32.mxu0 %v828
    %933 = vmatmul.mubr.f32.gmra.mrb[0].mxu0 %v827
    %v934 = vpop.f32.mrb[0].mxu0
    %v935 = vadd.f32 %v866, %v934
    %v936 = vpop.f32.mrb[0].mxu0
    %937 = vdwg.mxu0
    %vm938 = vcmask 25600
    %939 = vst.msk [vmem:[#allocation13] sm:$0x3] %vm938, %v935
    %vm940 = vcmask 58368
    %941 = vst.msk [vmem:[#allocation14] sm:$0x3] %vm940, %v503
    %vm942 = vcmask 123904
    %943 = vst.msk [vmem:[#allocation16] sm:$0x3] %vm942, %v487
    // Predicated region
    $region86: #{tpu_custom_call.1} parent=1 // pred_check
      _
    $region87: #{tpu_custom_call.1} parent=1 // pred_check_branch
      %945 = sbr.rel (0) target = $region89
    $region88: #{tpu_custom_call.1} parent=1 // pred_region
      %s947 = ssub.s32 32, 32
      %948 = vsyncadd [#allocation4], %s947
      %s950 = sshll.u32 [#allocation13], 4
      %s951 = int_to_ptr.vmem [resolvable:$true] %s950
      %953 = dma.vmem_to_hbm [thread:$0]  %s951, 32, %s15, [#allocation4]
    $region89: #{tpu_custom_call.1} parent=1 // pred_fallthru
      _
    // Predicated region
    $region90: #{tpu_custom_call.1} parent=1 // pred_check
      _
    $region91: #{tpu_custom_call.1} parent=1 // pred_check_branch
      %955 = sbr.rel (0) target = $region93
    $region92: #{tpu_custom_call.1} parent=1 // pred_region
      %s957 = ssub.s32 32, 32
      %958 = vsyncadd [#allocation15], %s957
      %s960 = sshll.u32 [#allocation14], 4
      %s961 = int_to_ptr.vmem [resolvable:$true] %s960
      %963 = dma.vmem_to_hbm [thread:$0]  %s961, 32, %s16, [#allocation15]
    $region93: #{tpu_custom_call.1} parent=1 // pred_fallthru
      _
    // Predicated region
    $region94: #{tpu_custom_call.1} parent=1 // pred_check
      _
    $region95: #{tpu_custom_call.1} parent=1 // pred_check_branch
      %965 = sbr.rel (0) target = $region97
    $region96: #{tpu_custom_call.1} parent=1 // pred_region
      %s967 = ssub.s32 32, 32
      %968 = vsyncadd [#allocation15], %s967
      %s970 = sshll.u32 [#allocation16], 4
      %s971 = int_to_ptr.vmem [resolvable:$true] %s970
      %973 = dma.vmem_to_hbm [thread:$0]  %s971, 32, %s17, [#allocation15]
    $region97: #{tpu_custom_call.1} parent=1 // pred_fallthru
      _
    // Predicated region
    $region98: #{tpu_custom_call.1} parent=1 // pred_check
      _
    $region99: #{tpu_custom_call.1} parent=1 // pred_check_branch
      %975 = sbr.rel (0) target = $region101
    $region100: #{tpu_custom_call.1} parent=1 // pred_region
      %976 = dma.done [#allocation4], 32
    $region101: #{tpu_custom_call.1} parent=1 // pred_fallthru
      _
    // Predicated region
    $region102: #{tpu_custom_call.1} parent=1 // pred_check
      _
    $region103: #{tpu_custom_call.1} parent=1 // pred_check_branch
      %978 = sbr.rel (0) target = $region105
    $region104: #{tpu_custom_call.1} parent=1 // pred_region
      %979 = dma.done [#allocation15], 32
    $region105: #{tpu_custom_call.1} parent=1 // pred_fallthru
      _
    // Predicated region
    $region106: #{tpu_custom_call.1} parent=1 // pred_check
      _
    $region107: #{tpu_custom_call.1} parent=1 // pred_check_branch
      %981 = sbr.rel (0) target = $region109
    $region108: #{tpu_custom_call.1} parent=1 // pred_region
      %982 = dma.done [#allocation15], 32
    $region109: #{tpu_custom_call.1} parent=1 // pred_fallthru
      _
    %983 = vsyncpa [#allocation3], 1
    %984 = vsyncpa [#allocation6], 1
    %985 = vsyncpa [#allocation9], 1
    %986 = vsyncpa [#allocation12], 1
    %987 = vsyncpa [#allocation4], 1
    %988 = vsyncpa [#allocation15], 1

</llo_original>
